<compile_context>
chip_gen: v6e
topology: v6e:2x2x1
jax: 0.10.0
libtpu: 0.0.40
codegen_flags: <defaults>
</compile_context>

<pallas_src>
import functools

import jax
import jax.numpy as jnp
from jax.experimental import pallas as pl
from jax.experimental.pallas import tpu as pltpu


def _round_up(x, m):
    return ((x + m - 1) // m) * m


def channel_attention_kernel(x_ref, w1t_ref, b1_ref, w2t_ref, b2_ref, o_ref,
                             sum_acc, max_acc, *, hw_true, hw_padded, hw_tile):
    # Grid: (batch, spatial_tiles).  x_ref block: (1, C, hw_tile).
    t = pl.program_id(1)

    @pl.when(t == 0)
    def _init():
        sum_acc[...] = jnp.zeros_like(sum_acc)
        max_acc[...] = jnp.full_like(max_acc, -jnp.inf)

    x = x_ref[...].astype(jnp.float32)                       # (1, C, hw_tile)

    if hw_padded != hw_true:
        # Padded lanes are zero in HBM (exact for the sum); mask them for max.
        lane = jax.lax.broadcasted_iota(jnp.int32, x.shape, 2)
        valid = (t * hw_tile + lane) < hw_true
        x_for_max = jnp.where(valid, x, -jnp.inf)
    else:
        x_for_max = x

    sum_acc[...] += jnp.sum(x, axis=2)                       # (1, C)
    max_acc[...] = jnp.maximum(max_acc[...], jnp.max(x_for_max, axis=2))

    @pl.when(t == pl.num_programs(1) - 1)
    def _finalize():
        avg = sum_acc[...] * (1.0 / float(hw_true))          # (1, C)
        mx = max_acc[...]                                    # (1, C)
        w1t = w1t_ref[...]                                   # (C, mid)
        b1 = b1_ref[...]                                     # (1, mid)
        w2t = w2t_ref[...]                                   # (mid, C)
        b2 = b2_ref[...]                                     # (1, C)

        def bottleneck(p):
            h = jnp.dot(p, w1t, preferred_element_type=jnp.float32) + b1
            h = jnp.maximum(h, 0.0)                          # ReLU
            return jnp.dot(h, w2t, preferred_element_type=jnp.float32) + b2

        s = jax.nn.sigmoid(bottleneck(avg) + bottleneck(mx))  # (1, C)
        o_ref[...] = s[None].astype(o_ref.dtype)               # (1, 1, C)


def channel_attention(x, w1, b1, w2, b2, *, hw_tile=None):
    """x: (B, C, H, W).  w1: (mid, C), b1: (mid,), w2: (C, mid), b2: (C,)."""
    B, C, H, W = x.shape
    mid = w1.shape[0]
    hw = H * W

    # Lane-dense spatial tile: multiple of 128, capped so double-buffered input
    # blocks stay far under even v7x's 64 MiB VMEM.
    if hw_tile is None:
        hw_tile = min(2048, _round_up(hw, 128))
    hw_tile = max(128, _round_up(hw_tile, 128))
    hw_padded = _round_up(hw, hw_tile)
    num_hw_tiles = hw_padded // hw_tile

    x_flat = x.reshape(B, C, hw)
    if hw_padded != hw:
        x_flat = jnp.pad(x_flat, ((0, 0), (0, 0), (0, hw_padded - hw)))

    # Pre-transpose weights so the kernel does plain row-major matmuls.
    w1t = jnp.asarray(w1.T, jnp.float32)                 # (C, mid)
    w2t = jnp.asarray(w2.T, jnp.float32)                 # (mid, C)
    b1r = jnp.asarray(b1, jnp.float32).reshape(1, mid)
    b2r = jnp.asarray(b2, jnp.float32).reshape(1, C)

    kernel = functools.partial(
        channel_attention_kernel,
        hw_true=hw, hw_padded=hw_padded, hw_tile=hw_tile)

    s = pl.pallas_call(
        kernel,
        out_shape=jax.ShapeDtypeStruct((B, 1, C), jnp.float32),
        grid_spec=pltpu.PrefetchScalarGridSpec(
            num_scalar_prefetch=0,
            grid=(B, num_hw_tiles),
            in_specs=[
                pl.BlockSpec((1, C, hw_tile), lambda b, t: (b, 0, t)),
                # Constant block index -> weights/biases DMA'd once and kept
                # resident across the whole grid.
                pl.BlockSpec((C, mid), lambda b, t: (0, 0)),
                pl.BlockSpec((1, mid), lambda b, t: (0, 0)),
                pl.BlockSpec((mid, C), lambda b, t: (0, 0)),
                pl.BlockSpec((1, C), lambda b, t: (0, 0)),
            ],
            out_specs=pl.BlockSpec((1, 1, C), lambda b, t: (b, 0, 0)),
            scratch_shapes=[pltpu.VMEM((1, C), jnp.float32),   # running sum
                            pltpu.VMEM((1, C), jnp.float32)],  # running max
        ),
        compiler_params=pltpu.CompilerParams(
            dimension_semantics=("parallel", "arbitrary")),
    )(x_flat, w1t, b1r, w2t, b2r)

    s = s.reshape(B, C)
    # Module semantics: output is the broadcast attention map (no x * s here);
    # the broadcast is a cheap XLA op outside the kernel.
    return jnp.broadcast_to(s[:, :, None, None], (B, C, H, W)).astype(x.dtype)


def channel_attention_ref(x, w1, b1, w2, b2):
    """Pure-JAX reference mirroring the PyTorch forward."""
    B, C, H, W = x.shape
    avg_pool = jnp.mean(x, axis=(2, 3))
    max_pool = jnp.max(x, axis=(2, 3))

    def bottleneck(p):
        h = jnp.maximum(p @ w1.T + b1, 0.0)
        return h @ w2.T + b2

    s = jax.nn.sigmoid(bottleneck(avg_pool) + bottleneck(max_pool))
    return jnp.broadcast_to(s[:, :, None, None], (B, C, H, W))


if __name__ == "__main__":
    # Module config: n_channels_in=32, reduction_ratio=16 -> middle_layer_size=2
    B, C, H, W = 2, 32, 16, 16
    reduction_ratio = 16
    mid = int(C / float(reduction_ratio))

    key = jax.random.PRNGKey(0)
    kx, k1, k2, k3, k4 = jax.random.split(key, 5)

    x = jax.random.normal(kx, (B, C, H, W), dtype=jnp.float32)
    # Deterministic "Linear" parameters (shapes match nn.Linear(C, mid), nn.Linear(mid, C)).
    w1 = jax.random.normal(k1, (mid, C), dtype=jnp.float32) * 0.1
    b1 = jax.random.normal(k2, (mid,), dtype=jnp.float32) * 0.1
    w2 = jax.random.normal(k3, (C, mid), dtype=jnp.float32) * 0.1
    b2 = jax.random.normal(k4, (C,), dtype=jnp.float32) * 0.1

    # Multi-tile spatial accumulation path: hw=256, tile=128 -> 2 spatial steps.
    out = channel_attention(x, w1, b1, w2, b2, hw_tile=128)
    out = jax.block_until_ready(out)
    ref = channel_attention_ref(x, w1, b1, w2, b2)
    assert out.shape == (B, C, H, W)
    assert jnp.allclose(out, ref, atol=1e-5, rtol=1e-5)

    # Ragged spatial size (hw=100 padded to 128) exercises the in-kernel mask.
    x2 = jax.random.normal(kx, (B, C, 10, 10), dtype=jnp.float32)
    out2 = jax.block_until_ready(channel_attention(x2, w1, b1, w2, b2))
    ref2 = channel_attention_ref(x2, w1, b1, w2, b2)
    assert jnp.allclose(out2, ref2, atol=1e-5, rtol=1e-5)

    print("KERNEL_OK")
</pallas_src>

<mosaic_0001>
module attributes {stable_mosaic.version = 11 : i64} {
  func.func @channel_attention_kernel(%arg0: i32, %arg1: i32, %arg2: memref<1x32x128xf32, #tpu.memory_space<vmem>>, %arg3: memref<32x2xf32, #tpu.memory_space<vmem>>, %arg4: memref<1x2xf32, #tpu.memory_space<vmem>>, %arg5: memref<2x32xf32, #tpu.memory_space<vmem>>, %arg6: memref<1x32xf32, #tpu.memory_space<vmem>>, %arg7: memref<1x1x32xf32, #tpu.memory_space<vmem>>, %arg8: memref<1x32xf32, #tpu.memory_space<vmem>>, %arg9: memref<1x32xf32, #tpu.memory_space<vmem>>) attributes {dimension_semantics = [#tpu.dimension_semantics<parallel>, #tpu.dimension_semantics<arbitrary>], iteration_bounds = array<i64: 2, 2>, scalar_prefetch = 0 : i64, scratch_operands = 2 : i64, tpu.core_type = #tpu.core_type<tc>, window_params = [{transform_indices = @transform_0, window_bounds = array<i64: 1, 32, 128>}, {pipeline_mode = #tpu.pipeline_mode<synchronous>, transform_indices = @transform_1, window_bounds = array<i64: 32, 2>}, {pipeline_mode = #tpu.pipeline_mode<synchronous>, transform_indices = @transform_2, window_bounds = array<i64: 1, 2>}, {pipeline_mode = #tpu.pipeline_mode<synchronous>, transform_indices = @transform_3, window_bounds = array<i64: 2, 32>}, {pipeline_mode = #tpu.pipeline_mode<synchronous>, transform_indices = @transform_4, window_bounds = array<i64: 1, 32>}, {transform_indices = @transform_5, window_bounds = array<i64: 1, 1, 32>}]} {
    %c0_i32 = arith.constant 0 : i32
    %0 = arith.cmpi eq, %arg1, %c0_i32 : i32
    %1 = arith.extui %0 : i1 to i32
    %c0_i32_0 = arith.constant 0 : i32
    %2 = arith.cmpi ne, %1, %c0_i32_0 : i32
    scf.if %2 {
      %cst_13 = arith.constant 0.000000e+00 : f32
      %15 = vector.broadcast %cst_13 : f32 to vector<1x32xf32>
      %c0_14 = arith.constant 0 : index
      %c0_15 = arith.constant 0 : index
      %16 = vector.load %arg8[%c0_14, %c0_15] : memref<1x32xf32, #tpu.memory_space<vmem>>, vector<1x32xf32>
      tpu.vector_store %arg8[%c0_14, %c0_15], %15 {strides = array<i32>} : memref<1x32xf32, #tpu.memory_space<vmem>>, vector<1x32xf32>,
      %cst_16 = arith.constant 0xFF800000 : f32
      %17 = vector.broadcast %cst_16 : f32 to vector<1x32xf32>
      %c0_17 = arith.constant 0 : index
      %c0_18 = arith.constant 0 : index
      %18 = vector.load %arg9[%c0_17, %c0_18] : memref<1x32xf32, #tpu.memory_space<vmem>>, vector<1x32xf32>
      tpu.vector_store %arg9[%c0_17, %c0_18], %17 {strides = array<i32>} : memref<1x32xf32, #tpu.memory_space<vmem>>, vector<1x32xf32>,
    } else {
    }
    %c0 = arith.constant 0 : index
    %c0_1 = arith.constant 0 : index
    %c0_2 = arith.constant 0 : index
    %3 = vector.load %arg2[%c0, %c0_1, %c0_2] : memref<1x32x128xf32, #tpu.memory_space<vmem>>, vector<1x32x128xf32>
    %c0_3 = arith.constant 0 : index
    %c0_4 = arith.constant 0 : index
    %4 = vector.load %arg8[%c0_3, %c0_4] : memref<1x32xf32, #tpu.memory_space<vmem>>, vector<1x32xf32>
    %cst = arith.constant dense<0.000000e+00> : vector<1x32xf32>
    %5 = vector.multi_reduction <add>, %3, %cst [2] : vector<1x32x128xf32> to vector<1x32xf32>
    %6 = arith.addf %4, %5 : vector<1x32xf32>
    %c0_5 = arith.constant 0 : index
    %c0_6 = arith.constant 0 : index
    %7 = vector.load %arg8[%c0_5, %c0_6] : memref<1x32xf32, #tpu.memory_space<vmem>>, vector<1x32xf32>
    tpu.vector_store %arg8[%c0_5, %c0_6], %6 {strides = array<i32>} : memref<1x32xf32, #tpu.memory_space<vmem>>, vector<1x32xf32>,
    %c0_7 = arith.constant 0 : index
    %c0_8 = arith.constant 0 : index
    %8 = vector.load %arg9[%c0_7, %c0_8] : memref<1x32xf32, #tpu.memory_space<vmem>>, vector<1x32xf32>
    %cst_9 = arith.constant dense<0xFF800000> : vector<1x32xf32>
    %9 = vector.multi_reduction <maximumf>, %3, %cst_9 [2] : vector<1x32x128xf32> to vector<1x32xf32>
    %10 = arith.maximumf %8, %9 : vector<1x32xf32>
    %c0_10 = arith.constant 0 : index
    %c0_11 = arith.constant 0 : index
    %11 = vector.load %arg9[%c0_10, %c0_11] : memref<1x32xf32, #tpu.memory_space<vmem>>, vector<1x32xf32>
    tpu.vector_store %arg9[%c0_10, %c0_11], %10 {strides = array<i32>} : memref<1x32xf32, #tpu.memory_space<vmem>>, vector<1x32xf32>,
    %c1_i32 = arith.constant 1 : i32
    %12 = arith.cmpi eq, %arg1, %c1_i32 : i32
    %13 = arith.extui %12 : i1 to i32
    %c0_i32_12 = arith.constant 0 : i32
    %14 = arith.cmpi ne, %13, %c0_i32_12 : i32
    scf.if %14 {
      %c0_13 = arith.constant 0 : index
      %c0_14 = arith.constant 0 : index
      %15 = vector.load %arg8[%c0_13, %c0_14] : memref<1x32xf32, #tpu.memory_space<vmem>>, vector<1x32xf32>
      %cst_15 = arith.constant 3.906250e-03 : f32
      %16 = vector.broadcast %cst_15 : f32 to vector<1x32xf32>
      %17 = arith.mulf %15, %16 : vector<1x32xf32>
      %c0_16 = arith.constant 0 : index
      %c0_17 = arith.constant 0 : index
      %18 = vector.load %arg9[%c0_16, %c0_17] : memref<1x32xf32, #tpu.memory_space<vmem>>, vector<1x32xf32>
      %c0_18 = arith.constant 0 : index
      %c0_19 = arith.constant 0 : index
      %19 = vector.load %arg3[%c0_18, %c0_19] : memref<32x2xf32, #tpu.memory_space<vmem>>, vector<32x2xf32>
      %c0_20 = arith.constant 0 : index
      %c0_21 = arith.constant 0 : index
      %20 = vector.load %arg4[%c0_20, %c0_21] : memref<1x2xf32, #tpu.memory_space<vmem>>, vector<1x2xf32>
      %c0_22 = arith.constant 0 : index
      %c0_23 = arith.constant 0 : index
      %21 = vector.load %arg5[%c0_22, %c0_23] : memref<2x32xf32, #tpu.memory_space<vmem>>, vector<2x32xf32>
      %c0_24 = arith.constant 0 : index
      %c0_25 = arith.constant 0 : index
      %22 = vector.load %arg6[%c0_24, %c0_25] : memref<1x32xf32, #tpu.memory_space<vmem>>, vector<1x32xf32>
      %cst_26 = arith.constant dense<0.000000e+00> : vector<1x2xf32>
      %23 = tpu.matmul %17, %19, %cst_26 {dimension_numbers = #tpu.dot_dimension_numbers<[1], [0], [0], [1], [0, 0, 1, 1], [], []>} : vector<1x32xf32>, vector<32x2xf32>, vector<1x2xf32> -> vector<1x2xf32>
      %24 = arith.addf %23, %20 : vector<1x2xf32>
      %cst_27 = arith.constant 0.000000e+00 : f32
      %25 = vector.broadcast %cst_27 : f32 to vector<1x2xf32>
      %26 = arith.maximumf %24, %25 : vector<1x2xf32>
      %cst_28 = arith.constant dense<0.000000e+00> : vector<1x32xf32>
      %27 = tpu.matmul %26, %21, %cst_28 {dimension_numbers = #tpu.dot_dimension_numbers<[1], [0], [0], [1], [0, 0, 1, 1], [], []>} : vector<1x2xf32>, vector<2x32xf32>, vector<1x32xf32> -> vector<1x32xf32>
      %28 = arith.addf %27, %22 : vector<1x32xf32>
      %cst_29 = arith.constant dense<0.000000e+00> : vector<1x2xf32>
      %29 = tpu.matmul %18, %19, %cst_29 {dimension_numbers = #tpu.dot_dimension_numbers<[1], [0], [0], [1], [0, 0, 1, 1], [], []>} : vector<1x32xf32>, vector<32x2xf32>, vector<1x2xf32> -> vector<1x2xf32>
      %30 = arith.addf %29, %20 : vector<1x2xf32>
      %cst_30 = arith.constant 0.000000e+00 : f32
      %31 = vector.broadcast %cst_30 : f32 to vector<1x2xf32>
      %32 = arith.maximumf %30, %31 : vector<1x2xf32>
      %cst_31 = arith.constant dense<0.000000e+00> : vector<1x32xf32>
      %33 = tpu.matmul %32, %21, %cst_31 {dimension_numbers = #tpu.dot_dimension_numbers<[1], [0], [0], [1], [0, 0, 1, 1], [], []>} : vector<1x2xf32>, vector<2x32xf32>, vector<1x32xf32> -> vector<1x32xf32>
      %34 = arith.addf %33, %22 : vector<1x32xf32>
      %35 = arith.addf %28, %34 : vector<1x32xf32>
      %36 = arith.negf %35 : vector<1x32xf32>
      %37 = math.exp %36 : vector<1x32xf32>
      %cst_32 = arith.constant 1.000000e+00 : f32
      %38 = vector.broadcast %cst_32 : f32 to vector<1x32xf32>
      %39 = arith.addf %38, %37 : vector<1x32xf32>
      %40 = arith.divf %38, %39 : vector<1x32xf32>
      %41 = vector.shape_cast %40 : vector<1x32xf32> to vector<1x1x32xf32>
      %c0_33 = arith.constant 0 : index
      %c0_34 = arith.constant 0 : index
      %c0_35 = arith.constant 0 : index
      %42 = vector.load %arg7[%c0_33, %c0_34, %c0_35] : memref<1x1x32xf32, #tpu.memory_space<vmem>>, vector<1x1x32xf32>
      tpu.vector_store %arg7[%c0_33, %c0_34, %c0_35], %41 {strides = array<i32>} : memref<1x1x32xf32, #tpu.memory_space<vmem>>, vector<1x1x32xf32>,
    } else {
    }
    return
  }
  func.func @transform_0(%arg0: i32, %arg1: i32) -> (i32, i32, i32) {
    %c0_i32 = arith.constant 0 : i32
    %c0_i32_0 = arith.constant 0 : i32
    return %arg0, %c0_i32, %arg1 : i32, i32, i32
  }
  func.func @transform_1(%arg0: i32, %arg1: i32) -> (i32, i32) {
    %c0_i32 = arith.constant 0 : i32
    %c0_i32_0 = arith.constant 0 : i32
    %c0_i32_1 = arith.constant 0 : i32
    return %c0_i32, %c0_i32_0 : i32, i32
  }
  func.func @transform_2(%arg0: i32, %arg1: i32) -> (i32, i32) {
    %c0_i32 = arith.constant 0 : i32
    %c0_i32_0 = arith.constant 0 : i32
    %c0_i32_1 = arith.constant 0 : i32
    return %c0_i32, %c0_i32_0 : i32, i32
  }
  func.func @transform_3(%arg0: i32, %arg1: i32) -> (i32, i32) {
    %c0_i32 = arith.constant 0 : i32
    %c0_i32_0 = arith.constant 0 : i32
    %c0_i32_1 = arith.constant 0 : i32
    return %c0_i32, %c0_i32_0 : i32, i32
  }
  func.func @transform_4(%arg0: i32, %arg1: i32) -> (i32, i32) {
    %c0_i32 = arith.constant 0 : i32
    %c0_i32_0 = arith.constant 0 : i32
    %c0_i32_1 = arith.constant 0 : i32
    return %c0_i32, %c0_i32_0 : i32, i32
  }
  func.func @transform_5(%arg0: i32, %arg1: i32) -> (i32, i32, i32) {
    %c0_i32 = arith.constant 0 : i32
    %c0_i32_0 = arith.constant 0 : i32
    %c0_i32_1 = arith.constant 0 : i32
    return %arg0, %c0_i32, %c0_i32_0 : i32, i32, i32
  }
}

</mosaic_0001>

<llo_original>
// kernel: tpu_custom_call.1
$region0: #{tpu_custom_call.1}
  #allocation0 [shape = 'u32[]', space=smem, size = 0x4, offset = 0x4, fixed_abs, tag = 'smem constant byte address 0x4 - core index']
  #allocation1 [shape = 'u32[144,128]{1,0:T(1,128)}', space=vmem, size = 0x12000, scoped, tag = 'internal scratch']
  #allocation2 [shape = 'f32[1,32]{1,0:T(1,128)}', space=vmem, size = 0x200, scoped, tag = 'scratch operand']
  #allocation3 [shape = 'f32[1,32]{1,0:T(1,128)}', space=vmem, size = 0x200, scoped, tag = 'scratch operand']
  %s0 = inlined_call_operand.hbm [shape: f32[2,32,256], index: 0, kind: input, shape index: {}]
  %s1 = inlined_call_operand.vmem [shape: f32[32,2], index: 1, kind: input, shape index: {}]
  %s2 = inlined_call_operand.vmem [shape: f32[1,2], index: 2, kind: input, shape index: {}]
  %s3 = inlined_call_operand.vmem [shape: f32[2,32], index: 3, kind: input, shape index: {}]
  %s4 = inlined_call_operand.vmem [shape: f32[1,32], index: 4, kind: input, shape index: {}]
  %s5 = inlined_call_operand.hbm [shape: f32[2,1,32], index: 5, kind: output, shape index: {}]
  %s6 = sld [smem:[#allocation0]]
  $region65: #{tpu_custom_call.1} parent=0
    _
  %s8 = ssub.s32 1, %s6
  %s9 = scalar_select 0, %s8, %s6
  $region1: #{tpu_custom_call.1} parent=0
    #allocation4 [shape = 'u8[32768]{0}', space=vmem, size = 0x8000, scoped, tag = 'input window, operand 0']
    #allocation5 [shape = 's32[2]{0}', space=sflag, size = 0x8, scoped, tag = 'scoped memory for tpu_custom_call.1']
    #allocation6 [shape = 's32[2]{0}', space=sflag, size = 0x8, scoped, tag = 'scoped memory for tpu_custom_call.1']
    #allocation7 [shape = 'u8[1024]{0}', space=vmem, size = 0x400, scoped, tag = 'output window, operand 0']
    %10 = vsyncpa [#allocation5], 0
    %s11 = scalar_lea.sflag [#allocation5], 1
    %12 = vsyncpa %s11, 0
    %13 = vsyncpa [#allocation6], 0
    %s14 = scalar_lea.sflag [#allocation6], 1
    %15 = vsyncpa %s14, 0
    loop: start=0, step=1, limit=6
    $region2: #{tpu_custom_call.1} parent=1 // loop_pre_header
      _
    $region3: #{tpu_custom_call.1} parent=1 // loop_header
      %s17 = sphi 0, %s21
      %p18 = scmp.ge.s32.totalorder %s17, 6
      %s24 = sphi 0, %s36
      %s25 = sphi 0, %s32
      %s26 = sphi 0, %s24
      %s27 = sphi 0, %s25
      %s28 = sphi 0, %s26
      %s29 = sphi 0, %s27
      %s41 = sphi 0, %s43
      %s44 = sphi 0, %s41
      %s45 = sphi 0, %s44
      %s61 = sphi 0, %s45
      %s65 = sphi 0, %s65
      %s67 = sphi 0, %s65
      %s68 = sphi 0, %s67
      %s82 = sphi 0, %s68
      %s86 = sphi 0, %s86
      %s88 = sphi 0, %s86
      %s89 = sphi 0, %s88
      %s103 = sphi 0, %s89
      %s107 = sphi 0, %s107
      %s109 = sphi 0, %s107
      %s110 = sphi 0, %s109
      %s124 = sphi 0, %s110
      %s128 = sphi 0, %s128
      %s130 = sphi 0, %s128
      %s131 = sphi 0, %s130
      %s145 = sphi 0, %s131
      %s151 = sphi 0, %s153
      %s154 = sphi 0, %s151
      %s155 = sphi 0, %s154
      %s171 = sphi 0, %s155
    $region4: #{tpu_custom_call.1} parent=1 // loop_header_branch
      %20 = sbr.rel (%p18) target = $region8
    $region5: #{tpu_custom_call.1} parent=1 // loop_body
      %s22 = ssub.s32 %s17, 1
      %s23 = ssub.s32 %s17, 2
      %s30 = sadd.s32 1, %s25
      %p31 = scmp.ge.s32.totalorder %s30, 2
      %s32 = scalar_select %p31, 0, %s30
      %s33 = sadd.s32 1, %s24
      %s34 = scalar_select %p31, %s33, %s24
      %p35 = scmp.ge.s32.totalorder %s34, 2
      %s36 = scalar_select %p35, 0, %s34
      %s37 = ssub.s32 %s24, %s36
      %s38 = ssub.s32 %s25, %s32
      %s39 = sor.u32 %s37, %s38
      %p40 = scmp.eq.s32.totalorder %s39, 0
      %s42 = sadd.s32 %s41, 1
      %s43 = scalar_select %p40, %s41, %s42
      %p46 = pneg %p40
      %p47 = scmp.eq.s32.totalorder %s17, 3
      %p48 = por %p46, %p47
      %p49 = scmp.ne.s32.totalorder %s41, %s44
      %p50 = scmp.eq.s32.totalorder %s17, 0
      %p51 = por %p49, %p50
      %p52 = scmp.ne.s32.totalorder %s41, %s44
      %p53 = scmp.eq.s32.totalorder %s22, 3
      %p54 = por %p52, %p53
      %p55 = scmp.ne.s32.totalorder %s44, %s45
      %p56 = scmp.eq.s32.totalorder %s22, 0
      %p57 = por %p55, %p56
      %p58 = scmp.ne.s32.totalorder %s44, %s45
      %p59 = scmp.eq.s32.totalorder %s23, 3
      %p60 = por %p58, %p59
      %p62 = scmp.ne.s32.totalorder %s45, %s61
      %p63 = scmp.eq.s32.totalorder %s23, 0
      %p64 = por %p62, %p63
      %s66 = sadd.s32 %s65, 1
      %p69 = scmp.eq.s32.totalorder %s17, 3
      %p70 = scmp.ne.s32.totalorder %s65, %s67
      %p71 = scmp.eq.s32.totalorder %s17, 0
      %p72 = por %p70, %p71
      %p73 = scmp.ne.s32.totalorder %s65, %s67
      %p74 = scmp.eq.s32.totalorder %s22, 3
      %p75 = por %p73, %p74
      %p76 = scmp.ne.s32.totalorder %s67, %s68
      %p77 = scmp.eq.s32.totalorder %s22, 0
      %p78 = por %p76, %p77
      %p79 = scmp.ne.s32.totalorder %s67, %s68
      %p80 = scmp.eq.s32.totalorder %s23, 3
      %p81 = por %p79, %p80
      %p83 = scmp.ne.s32.totalorder %s68, %s82
      %p84 = scmp.eq.s32.totalorder %s23, 0
      %p85 = por %p83, %p84
      %s87 = sadd.s32 %s86, 1
      %p90 = scmp.eq.s32.totalorder %s17, 3
      %p91 = scmp.ne.s32.totalorder %s86, %s88
      %p92 = scmp.eq.s32.totalorder %s17, 0
      %p93 = por %p91, %p92
      %p94 = scmp.ne.s32.totalorder %s86, %s88
      %p95 = scmp.eq.s32.totalorder %s22, 3
      %p96 = por %p94, %p95
      %p97 = scmp.ne.s32.totalorder %s88, %s89
      %p98 = scmp.eq.s32.totalorder %s22, 0
      %p99 = por %p97, %p98
      %p100 = scmp.ne.s32.totalorder %s88, %s89
      %p101 = scmp.eq.s32.totalorder %s23, 3
      %p102 = por %p100, %p101
      %p104 = scmp.ne.s32.totalorder %s89, %s103
      %p105 = scmp.eq.s32.totalorder %s23, 0
      %p106 = por %p104, %p105
      %s108 = sadd.s32 %s107, 1
      %p111 = scmp.eq.s32.totalorder %s17, 3
      %p112 = scmp.ne.s32.totalorder %s107, %s109
      %p113 = scmp.eq.s32.totalorder %s17, 0
      %p114 = por %p112, %p113
      %p115 = scmp.ne.s32.totalorder %s107, %s109
      %p116 = scmp.eq.s32.totalorder %s22, 3
      %p117 = por %p115, %p116
      %p118 = scmp.ne.s32.totalorder %s109, %s110
      %p119 = scmp.eq.s32.totalorder %s22, 0
      %p120 = por %p118, %p119
      %p121 = scmp.ne.s32.totalorder %s109, %s110
      %p122 = scmp.eq.s32.totalorder %s23, 3
      %p123 = por %p121, %p122
      %p125 = scmp.ne.s32.totalorder %s110, %s124
      %p126 = scmp.eq.s32.totalorder %s23, 0
      %p127 = por %p125, %p126
      %s129 = sadd.s32 %s128, 1
      %p132 = scmp.eq.s32.totalorder %s17, 3
      %p133 = scmp.ne.s32.totalorder %s128, %s130
      %p134 = scmp.eq.s32.totalorder %s17, 0
      %p135 = por %p133, %p134
      %p136 = scmp.ne.s32.totalorder %s128, %s130
      %p137 = scmp.eq.s32.totalorder %s22, 3
      %p138 = por %p136, %p137
      %p139 = scmp.ne.s32.totalorder %s130, %s131
      %p140 = scmp.eq.s32.totalorder %s22, 0
      %p141 = por %p139, %p140
      %p142 = scmp.ne.s32.totalorder %s130, %s131
      %p143 = scmp.eq.s32.totalorder %s23, 3
      %p144 = por %p142, %p143
      %p146 = scmp.ne.s32.totalorder %s131, %s145
      %p147 = scmp.eq.s32.totalorder %s23, 0
      %p148 = por %p146, %p147
      %s149 = ssub.s32 %s24, %s36
      %p150 = scmp.eq.s32.totalorder %s149, 0
      %s152 = sadd.s32 %s151, 1
      %s153 = scalar_select %p150, %s151, %s152
      %p156 = pneg %p150
      %p157 = scmp.eq.s32.totalorder %s17, 3
      %p158 = por %p156, %p157
      %p159 = scmp.ne.s32.totalorder %s151, %s154
      %p160 = scmp.eq.s32.totalorder %s17, 0
      %p161 = por %p159, %p160
      %p162 = scmp.ne.s32.totalorder %s151, %s154
      %p163 = scmp.eq.s32.totalorder %s22, 3
      %p164 = por %p162, %p163
      %p165 = scmp.ne.s32.totalorder %s154, %s155
      %p166 = scmp.eq.s32.totalorder %s22, 0
      %p167 = por %p165, %p166
      %p168 = scmp.ne.s32.totalorder %s154, %s155
      %p169 = scmp.eq.s32.totalorder %s23, 3
      %p170 = por %p168, %p169
      %p172 = scmp.ne.s32.totalorder %s155, %s171
      %p173 = scmp.eq.s32.totalorder %s23, 0
      %p174 = por %p172, %p173
      %p175 = scmp.le.s32.totalorder 1, %s17
      %p176 = scmp.lt.s32.totalorder %s17, 5
      %p177 = pnand %p175, %p176
      %p178 = pneg %p177
      // Predicated region
      $region9: #{tpu_custom_call.1} parent=5 // pred_check
        _
      $region10: #{tpu_custom_call.1} parent=5 // pred_check_branch
        %180 = sbr.rel (%p177) target = $region12
      $region11: #{tpu_custom_call.1} parent=5 // pred_region
        %s181 = ssub.s32 %s17, 1
        // Predicated region
        $region13: #{tpu_custom_call.1} parent=11 // pred_check
          %p182 = pneg %p78
        $region14: #{tpu_custom_call.1} parent=11 // pred_check_branch
          %184 = sbr.rel (%p182) target = $region16
        $region15: #{tpu_custom_call.1} parent=11 // pred_region
          _
        $region16: #{tpu_custom_call.1} parent=11 // pred_fallthru
          _
        // Predicated region
        $region17: #{tpu_custom_call.1} parent=11 // pred_check
          %p185 = pneg %p99
        $region18: #{tpu_custom_call.1} parent=11 // pred_check_branch
          %187 = sbr.rel (%p185) target = $region20
        $region19: #{tpu_custom_call.1} parent=11 // pred_region
          _
        $region20: #{tpu_custom_call.1} parent=11 // pred_fallthru
          _
        // Predicated region
        $region21: #{tpu_custom_call.1} parent=11 // pred_check
          %p188 = pneg %p120
        $region22: #{tpu_custom_call.1} parent=11 // pred_check_branch
          %190 = sbr.rel (%p188) target = $region24
        $region23: #{tpu_custom_call.1} parent=11 // pred_region
          _
        $region24: #{tpu_custom_call.1} parent=11 // pred_fallthru
          _
        // Predicated region
        $region25: #{tpu_custom_call.1} parent=11 // pred_check
          %p191 = pneg %p141
        $region26: #{tpu_custom_call.1} parent=11 // pred_check_branch
          %193 = sbr.rel (%p191) target = $region28
        $region27: #{tpu_custom_call.1} parent=11 // pred_region
          _
        $region28: #{tpu_custom_call.1} parent=11 // pred_fallthru
          _
      $region12: #{tpu_custom_call.1} parent=5 // pred_fallthru
        _
      %p194 = scmp.lt.s32.totalorder %s17, 4
      // Predicated region
      $region29: #{tpu_custom_call.1} parent=5 // pred_check
        %p195 = pneg %p194
      $region30: #{tpu_custom_call.1} parent=5 // pred_check_branch
        %197 = sbr.rel (%p195) target = $region32
      $region31: #{tpu_custom_call.1} parent=5 // pred_region
        // Predicated region
        $region33: #{tpu_custom_call.1} parent=31 // pred_check
          %p198 = pneg %p51
        $region34: #{tpu_custom_call.1} parent=31 // pred_check_branch
          %200 = sbr.rel (%p198) target = $region36
        $region35: #{tpu_custom_call.1} parent=31 // pred_region
          %s201 = sand.u32 %s41, 1
          %s202 = scalar_lea.sflag [#allocation5], %s201
          %s203 = sand.u32 %s41, 1
          %s204 = smul.addr %s203, 32
          %s205 = scalar_lea.vmem [#allocation4], %s204
          %s207 = ssub.s32 512, 512
          %208 = vsyncadd %s202, %s207
          %s209 = smul.addr %s24, 8
          %s210 = sadd.s32 %s25, %s209
          %s211 = smul.addr %s210, 128
          %s212 = scalar_lea.hbm %s0, %s211
          %s213 = sshll.u32 %s205, 4
          %s214 = int_to_ptr.vmem [resolvable:$true] %s213
          %219 = dma.hbm_to_vmem [thread:$0]  %s212, 512, %s214, %s202, 256, 128, 8
        $region36: #{tpu_custom_call.1} parent=31 // pred_fallthru
          _
      $region32: #{tpu_custom_call.1} parent=5 // pred_fallthru
        _
      %p220 = scmp.le.s32.totalorder 1, %s17
      %p221 = scmp.lt.s32.totalorder %s17, 5
      %p222 = pnand %p220, %p221
      %p223 = pneg %p222
      // Predicated region
      $region37: #{tpu_custom_call.1} parent=5 // pred_check
        _
      $region38: #{tpu_custom_call.1} parent=5 // pred_check_branch
        %225 = sbr.rel (%p222) target = $region40
      $region39: #{tpu_custom_call.1} parent=5 // pred_region
        %s226 = ssub.s32 %s17, 1
        %s227 = sand.u32 %s44, 1
        %s228 = scalar_lea.sflag [#allocation5], %s227
        %s229 = sand.u32 %s44, 1
        %s230 = smul.addr %s229, 32
        %s231 = scalar_lea.vmem [#allocation4], %s230
        // Predicated region
        $region41: #{tpu_custom_call.1} parent=39 // pred_check
          %p232 = pneg %p57
        $region42: #{tpu_custom_call.1} parent=39 // pred_check_branch
          %234 = sbr.rel (%p232) target = $region44
        $region43: #{tpu_custom_call.1} parent=39 // pred_region
          %235 = dma.done %s228, 512
        $region44: #{tpu_custom_call.1} parent=39 // pred_fallthru
          _
        %s236 = sand.u32 %s44, 1
        %s237 = scalar_lea.sflag [#allocation5], %s236
        %s238 = sand.u32 %s44, 1
        %s239 = smul.addr %s238, 32
        %s240 = scalar_lea.vmem [#allocation4], %s239
        %p241 = pneg %p57
        %p242 = pneg %p54
        %p243 = pneg %p78
        %p244 = pneg %p75
        %p245 = pneg %p99
        %p246 = pneg %p96
        %p247 = pneg %p120
        %p248 = pneg %p117
        %p249 = pneg %p141
        %p250 = pneg %p138
        %p251 = pneg %p167
        %p252 = pneg %p164
        %s253 = sand.u32 %s154, 1
        %s254 = scalar_lea.sflag [#allocation6], %s253
        %s255 = sand.u32 %s154, 1
        %s256 = scalar_lea.vmem [#allocation7], %s255
        %p257 = scmp.eq.s32.totalorder %s27, 0
        // Predicated region
        $region45: #{tpu_custom_call.1} parent=39 // pred_check
          %p258 = pneg %p257
        $region46: #{tpu_custom_call.1} parent=39 // pred_check_branch
          %260 = sbr.rel (%p258) target = $region48
        $region47: #{tpu_custom_call.1} parent=39 // pred_region
          %vm261 = vcmask 253952
          %262 = vst.msk [vmem:[#allocation2] sm:$0x1] %vm261, 0.0
          %263 = vst.msk [vmem:[#allocation3] sm:$0x1] %vm261, -inf
        $region48: #{tpu_custom_call.1} parent=39 // pred_fallthru
          _
        %v264 = vld [vmem:[%s231] sm:$0xff]
        %v265 = vld [vmem:[%s231 + $0x8] sm:$0xff]
        %v266 = vld [vmem:[%s231 + $0x10] sm:$0xff]
        %v267 = vld [vmem:[%s231 + $0x18] sm:$0xff]
        %v268 = vld [vmem:[#allocation2] sm:$0x1]
        %269 = vadd.xlane.f32.xlu0 %v264
        %v270 = vpop.xlane.xlu0 %269
        %271 = vadd.xlane.f32.xlu0 %v265
        %v272 = vpop.xlane.xlu0 %271
        %273 = vadd.xlane.f32.xlu0 %v266
        %v274 = vpop.xlane.xlu0 %273
        %275 = vadd.xlane.f32.xlu0 %v267
        %v276 = vpop.xlane.xlu0 %275
        %v281 = vlaneseq
        %v282 = vshrl.u32 %v281, 7
        %v283 = vsub.s32 0, %v282
        %v284 = vrot.slane %v270, %v283
        %v285 = vlaneseq
        %v286 = vshrl.u32 %v285, 7
        %v287 = vsub.s32 1, %v286
        %v288 = vrot.slane %v270, %v287
        %v289 = vlaneseq
        %v290 = vshrl.u32 %v289, 7
        %v291 = vsub.s32 2, %v290
        %v292 = vrot.slane %v270, %v291
        %v293 = vlaneseq
        %v294 = vshrl.u32 %v293, 7
        %v295 = vsub.s32 3, %v294
        %v296 = vrot.slane %v270, %v295
        %v297 = vlaneseq
        %v298 = vshrl.u32 %v297, 7
        %v299 = vsub.s32 4, %v298
        %v300 = vrot.slane %v270, %v299
        %v301 = vlaneseq
        %v302 = vshrl.u32 %v301, 7
        %v303 = vsub.s32 5, %v302
        %v304 = vrot.slane %v270, %v303
        %v305 = vlaneseq
        %v306 = vshrl.u32 %v305, 7
        %v307 = vsub.s32 6, %v306
        %v308 = vrot.slane %v270, %v307
        %v309 = vlaneseq
        %v310 = vshrl.u32 %v309, 7
        %v311 = vsub.s32 7, %v310
        %v312 = vrot.slane %v270, %v311
        %v313 = vlaneseq
        %v314 = vshrl.u32 %v313, 7
        %v315 = vsub.s32 0, %v314
        %v316 = vrot.slane %v272, %v315
        %v317 = vlaneseq
        %v318 = vshrl.u32 %v317, 7
        %v319 = vsub.s32 1, %v318
        %v320 = vrot.slane %v272, %v319
        %v321 = vlaneseq
        %v322 = vshrl.u32 %v321, 7
        %v323 = vsub.s32 2, %v322
        %v324 = vrot.slane %v272, %v323
        %v325 = vlaneseq
        %v326 = vshrl.u32 %v325, 7
        %v327 = vsub.s32 3, %v326
        %v328 = vrot.slane %v272, %v327
        %v329 = vlaneseq
        %v330 = vshrl.u32 %v329, 7
        %v331 = vsub.s32 4, %v330
        %v332 = vrot.slane %v272, %v331
        %v333 = vlaneseq
        %v334 = vshrl.u32 %v333, 7
        %v335 = vsub.s32 5, %v334
        %v336 = vrot.slane %v272, %v335
        %v337 = vlaneseq
        %v338 = vshrl.u32 %v337, 7
        %v339 = vsub.s32 6, %v338
        %v340 = vrot.slane %v272, %v339
        %v341 = vlaneseq
        %v342 = vshrl.u32 %v341, 7
        %v343 = vsub.s32 7, %v342
        %v344 = vrot.slane %v272, %v343
        %v345 = vlaneseq
        %v346 = vshrl.u32 %v345, 7
        %v347 = vsub.s32 0, %v346
        %v348 = vrot.slane %v274, %v347
        %v349 = vlaneseq
        %v350 = vshrl.u32 %v349, 7
        %v351 = vsub.s32 1, %v350
        %v352 = vrot.slane %v274, %v351
        %v353 = vlaneseq
        %v354 = vshrl.u32 %v353, 7
        %v355 = vsub.s32 2, %v354
        %v356 = vrot.slane %v274, %v355
        %v357 = vlaneseq
        %v358 = vshrl.u32 %v357, 7
        %v359 = vsub.s32 3, %v358
        %v360 = vrot.slane %v274, %v359
        %v361 = vlaneseq
        %v362 = vshrl.u32 %v361, 7
        %v363 = vsub.s32 4, %v362
        %v364 = vrot.slane %v274, %v363
        %v365 = vlaneseq
        %v366 = vshrl.u32 %v365, 7
        %v367 = vsub.s32 5, %v366
        %v368 = vrot.slane %v274, %v367
        %v369 = vlaneseq
        %v370 = vshrl.u32 %v369, 7
        %v371 = vsub.s32 6, %v370
        %v372 = vrot.slane %v274, %v371
        %v373 = vlaneseq
        %v374 = vshrl.u32 %v373, 7
        %v375 = vsub.s32 7, %v374
        %v376 = vrot.slane %v274, %v375
        %v377 = vlaneseq
        %v378 = vshrl.u32 %v377, 7
        %v379 = vsub.s32 0, %v378
        %v380 = vrot.slane %v276, %v379
        %v381 = vlaneseq
        %v382 = vshrl.u32 %v381, 7
        %v383 = vsub.s32 1, %v382
        %v384 = vrot.slane %v276, %v383
        %v385 = vlaneseq
        %v386 = vshrl.u32 %v385, 7
        %v387 = vsub.s32 2, %v386
        %v388 = vrot.slane %v276, %v387
        %v389 = vlaneseq
        %v390 = vshrl.u32 %v389, 7
        %v391 = vsub.s32 3, %v390
        %v392 = vrot.slane %v276, %v391
        %v393 = vlaneseq
        %v394 = vshrl.u32 %v393, 7
        %v395 = vsub.s32 4, %v394
        %v396 = vrot.slane %v276, %v395
        %v397 = vlaneseq
        %v398 = vshrl.u32 %v397, 7
        %v399 = vsub.s32 5, %v398
        %v400 = vrot.slane %v276, %v399
        %v401 = vlaneseq
        %v402 = vshrl.u32 %v401, 7
        %v403 = vsub.s32 6, %v402
        %v404 = vrot.slane %v276, %v403
        %v405 = vlaneseq
        %v406 = vshrl.u32 %v405, 7
        %v407 = vsub.s32 7, %v406
        %v408 = vrot.slane %v276, %v407
        %v409 = vcombine.low %v284, %v288
        %v410 = vcombine.low %v292, %v296
        %v411 = vcombine.low %v300, %v304
        %v412 = vcombine.low %v308, %v312
        %v414 = vunpack.c.l.s4 1966171168
        %v415 = vunpack.c.0.s8 %v414
        %v416 = vlaneseq
        %v417 = vshrl.u32 %v416, 7
        %v418 = vsub.s32 %v415, %v417
        %v419 = vrot.slane %v409, %v418
        %v421 = vunpack.c.l.s4 1966171168
        %v422 = vunpack.c.0.s8 %v421
        %v423 = vlaneseq
        %v424 = vshrl.u32 %v423, 7
        %v425 = vsub.s32 %v422, %v424
        %v426 = vrot.slane %v410, %v425
        %v428 = vunpack.c.l.s4 1966171168
        %v429 = vunpack.c.0.s8 %v428
        %v430 = vlaneseq
        %v431 = vshrl.u32 %v430, 7
        %v432 = vsub.s32 %v429, %v431
        %v433 = vrot.slane %v411, %v432
        %v435 = vunpack.c.l.s4 1966171168
        %v436 = vunpack.c.0.s8 %v435
        %v437 = vlaneseq
        %v438 = vshrl.u32 %v437, 7
        %v439 = vsub.s32 %v436, %v438
        %v440 = vrot.slane %v412, %v439
        %v441 = vcombine.low %v419, %v426
        %v442 = vcombine.low %v433, %v440
        %v444 = vunpack.c.l.s4 1966171168
        %v445 = vunpack.c.0.s8 %v444
        %v446 = vlaneseq
        %v447 = vshrl.u32 %v446, 7
        %v448 = vsub.s32 %v445, %v447
        %v449 = vrot.slane %v441, %v448
        %v451 = vunpack.c.l.s4 1966171168
        %v452 = vunpack.c.0.s8 %v451
        %v453 = vlaneseq
        %v454 = vshrl.u32 %v453, 7
        %v455 = vsub.s32 %v452, %v454
        %v456 = vrot.slane %v442, %v455
        %v457 = vcombine.low %v449, %v456
        %v458 = vcombine.low %v316, %v320
        %v459 = vcombine.low %v324, %v328
        %v460 = vcombine.low %v332, %v336
        %v461 = vcombine.low %v340, %v344
        %v463 = vunpack.c.l.s4 1966171168
        %v464 = vunpack.c.0.s8 %v463
        %v465 = vlaneseq
        %v466 = vshrl.u32 %v465, 7
        %v467 = vsub.s32 %v464, %v466
        %v468 = vrot.slane %v458, %v467
        %v470 = vunpack.c.l.s4 1966171168
        %v471 = vunpack.c.0.s8 %v470
        %v472 = vlaneseq
        %v473 = vshrl.u32 %v472, 7
        %v474 = vsub.s32 %v471, %v473
        %v475 = vrot.slane %v459, %v474
        %v477 = vunpack.c.l.s4 1966171168
        %v478 = vunpack.c.0.s8 %v477
        %v479 = vlaneseq
        %v480 = vshrl.u32 %v479, 7
        %v481 = vsub.s32 %v478, %v480
        %v482 = vrot.slane %v460, %v481
        %v484 = vunpack.c.l.s4 1966171168
        %v485 = vunpack.c.0.s8 %v484
        %v486 = vlaneseq
        %v487 = vshrl.u32 %v486, 7
        %v488 = vsub.s32 %v485, %v487
        %v489 = vrot.slane %v461, %v488
        %v490 = vcombine.low %v468, %v475
        %v491 = vcombine.low %v482, %v489
        %v493 = vunpack.c.l.s4 1966171168
        %v494 = vunpack.c.0.s8 %v493
        %v495 = vlaneseq
        %v496 = vshrl.u32 %v495, 7
        %v497 = vsub.s32 %v494, %v496
        %v498 = vrot.slane %v490, %v497
        %v500 = vunpack.c.l.s4 1966171168
        %v501 = vunpack.c.0.s8 %v500
        %v502 = vlaneseq
        %v503 = vshrl.u32 %v502, 7
        %v504 = vsub.s32 %v501, %v503
        %v505 = vrot.slane %v491, %v504
        %v506 = vcombine.low %v498, %v505
        %v507 = vcombine.low %v348, %v352
        %v508 = vcombine.low %v356, %v360
        %v509 = vcombine.low %v364, %v368
        %v510 = vcombine.low %v372, %v376
        %v512 = vunpack.c.l.s4 1966171168
        %v513 = vunpack.c.0.s8 %v512
        %v514 = vlaneseq
        %v515 = vshrl.u32 %v514, 7
        %v516 = vsub.s32 %v513, %v515
        %v517 = vrot.slane %v507, %v516
        %v519 = vunpack.c.l.s4 1966171168
        %v520 = vunpack.c.0.s8 %v519
        %v521 = vlaneseq
        %v522 = vshrl.u32 %v521, 7
        %v523 = vsub.s32 %v520, %v522
        %v524 = vrot.slane %v508, %v523
        %v526 = vunpack.c.l.s4 1966171168
        %v527 = vunpack.c.0.s8 %v526
        %v528 = vlaneseq
        %v529 = vshrl.u32 %v528, 7
        %v530 = vsub.s32 %v527, %v529
        %v531 = vrot.slane %v509, %v530
        %v533 = vunpack.c.l.s4 1966171168
        %v534 = vunpack.c.0.s8 %v533
        %v535 = vlaneseq
        %v536 = vshrl.u32 %v535, 7
        %v537 = vsub.s32 %v534, %v536
        %v538 = vrot.slane %v510, %v537
        %v539 = vcombine.low %v517, %v524
        %v540 = vcombine.low %v531, %v538
        %v542 = vunpack.c.l.s4 1966171168
        %v543 = vunpack.c.0.s8 %v542
        %v544 = vlaneseq
        %v545 = vshrl.u32 %v544, 7
        %v546 = vsub.s32 %v543, %v545
        %v547 = vrot.slane %v539, %v546
        %v549 = vunpack.c.l.s4 1966171168
        %v550 = vunpack.c.0.s8 %v549
        %v551 = vlaneseq
        %v552 = vshrl.u32 %v551, 7
        %v553 = vsub.s32 %v550, %v552
        %v554 = vrot.slane %v540, %v553
        %v555 = vcombine.low %v547, %v554
        %v556 = vcombine.low %v380, %v384
        %v557 = vcombine.low %v388, %v392
        %v558 = vcombine.low %v396, %v400
        %v559 = vcombine.low %v404, %v408
        %v561 = vunpack.c.l.s4 1966171168
        %v562 = vunpack.c.0.s8 %v561
        %v563 = vlaneseq
        %v564 = vshrl.u32 %v563, 7
        %v565 = vsub.s32 %v562, %v564
        %v566 = vrot.slane %v556, %v565
        %v568 = vunpack.c.l.s4 1966171168
        %v569 = vunpack.c.0.s8 %v568
        %v570 = vlaneseq
        %v571 = vshrl.u32 %v570, 7
        %v572 = vsub.s32 %v569, %v571
        %v573 = vrot.slane %v557, %v572
        %v575 = vunpack.c.l.s4 1966171168
        %v576 = vunpack.c.0.s8 %v575
        %v577 = vlaneseq
        %v578 = vshrl.u32 %v577, 7
        %v579 = vsub.s32 %v576, %v578
        %v580 = vrot.slane %v558, %v579
        %v582 = vunpack.c.l.s4 1966171168
        %v583 = vunpack.c.0.s8 %v582
        %v584 = vlaneseq
        %v585 = vshrl.u32 %v584, 7
        %v586 = vsub.s32 %v583, %v585
        %v587 = vrot.slane %v559, %v586
        %v588 = vcombine.low %v566, %v573
        %v589 = vcombine.low %v580, %v587
        %v591 = vunpack.c.l.s4 1966171168
        %v592 = vunpack.c.0.s8 %v591
        %v593 = vlaneseq
        %v594 = vshrl.u32 %v593, 7
        %v595 = vsub.s32 %v592, %v594
        %v596 = vrot.slane %v588, %v595
        %v598 = vunpack.c.l.s4 1966171168
        %v599 = vunpack.c.0.s8 %v598
        %v600 = vlaneseq
        %v601 = vshrl.u32 %v600, 7
        %v602 = vsub.s32 %v599, %v601
        %v603 = vrot.slane %v589, %v602
        %v604 = vcombine.low %v596, %v603
        %605 = vset.pattern.permute.xlu0 0
        %606 = vperm.xlu0 %605, %v457
        %v607 = vpop.permute.xlu0 %606
        %608 = vset.pattern.permute.xlu0 0
        %609 = vperm.xlu0 %608, %v506
        %v610 = vpop.permute.xlu0 %609
        %611 = vset.pattern.permute.xlu0 0
        %612 = vperm.xlu0 %611, %v555
        %v613 = vpop.permute.xlu0 %612
        %614 = vset.pattern.permute.xlu0 0
        %615 = vperm.xlu0 %614, %v604
        %v616 = vpop.permute.xlu0 %615
        %v617 = vlaneseq
        %v618 = vand.u32 %v617, 127
        %v619 = vlaneseq
        %v620 = vshrl.u32 %v619, 7
        %v621 = vsub.s32 %v618, %v620
        %v622 = vrot.slane %v607, %v621
        %v623 = vadd.s32 %v618, 4294967288
        %v624 = vlaneseq
        %v625 = vshrl.u32 %v624, 7
        %v626 = vsub.s32 %v623, %v625
        %v627 = vrot.slane %v610, %v626
        %vm628 = vcmask 130112
        %v629 = vsel %vm628, %v627, %v622
        %v630 = vadd.s32 %v618, 4294967280
        %v631 = vlaneseq
        %v632 = vshrl.u32 %v631, 7
        %v633 = vsub.s32 %v630, %v632
        %v634 = vrot.slane %v613, %v633
        %vm635 = vcmask 195712
        %v636 = vsel %vm635, %v634, %v629
        %v637 = vadd.s32 %v618, 4294967272
        %v638 = vlaneseq
        %v639 = vshrl.u32 %v638, 7
        %v640 = vsub.s32 %v637, %v639
        %v641 = vrot.slane %v616, %v640
        %vm642 = vcmask 261312
        %v643 = vsel %vm642, %v641, %v636
        %v645 = vunpack.c.l.s4 1966171168
        %v646 = vunpack.c.0.s8 %v645
        %v647 = vlaneseq
        %v648 = vshrl.u32 %v647, 7
        %v649 = vsub.s32 %v646, %v648
        %v650 = vrot.slane %v643, %v649
        %v652 = vunpack.c.l.s4 1966171168
        %v653 = vunpack.c.0.s8 %v652
        %v654 = vlaneseq
        %v655 = vshrl.u32 %v654, 7
        %v656 = vsub.s32 %v653, %v655
        %v657 = vrot.slane %v650, %v656
        %v659 = vadd.f32 %v268, %v657
        %vm660 = vcmask 253952
        %661 = vst.msk [vmem:[#allocation2] sm:$0x1] %vm660, %v659
        %v662 = vld [vmem:[#allocation3] sm:$0x1]
        %663 = vmax.xlane.f32.xlu0 %v264
        %v664 = vpop.xlane.xlu0 %663
        %665 = vmax.xlane.f32.xlu0 %v265
        %v666 = vpop.xlane.xlu0 %665
        %667 = vmax.xlane.f32.xlu0 %v266
        %v668 = vpop.xlane.xlu0 %667
        %669 = vmax.xlane.f32.xlu0 %v267
        %v670 = vpop.xlane.xlu0 %669
        %v675 = vlaneseq
        %v676 = vshrl.u32 %v675, 7
        %v677 = vsub.s32 0, %v676
        %v678 = vrot.slane %v664, %v677
        %v679 = vlaneseq
        %v680 = vshrl.u32 %v679, 7
        %v681 = vsub.s32 1, %v680
        %v682 = vrot.slane %v664, %v681
        %v683 = vlaneseq
        %v684 = vshrl.u32 %v683, 7
        %v685 = vsub.s32 2, %v684
        %v686 = vrot.slane %v664, %v685
        %v687 = vlaneseq
        %v688 = vshrl.u32 %v687, 7
        %v689 = vsub.s32 3, %v688
        %v690 = vrot.slane %v664, %v689
        %v691 = vlaneseq
        %v692 = vshrl.u32 %v691, 7
        %v693 = vsub.s32 4, %v692
        %v694 = vrot.slane %v664, %v693
        %v695 = vlaneseq
        %v696 = vshrl.u32 %v695, 7
        %v697 = vsub.s32 5, %v696
        %v698 = vrot.slane %v664, %v697
        %v699 = vlaneseq
        %v700 = vshrl.u32 %v699, 7
        %v701 = vsub.s32 6, %v700
        %v702 = vrot.slane %v664, %v701
        %v703 = vlaneseq
        %v704 = vshrl.u32 %v703, 7
        %v705 = vsub.s32 7, %v704
        %v706 = vrot.slane %v664, %v705
        %v707 = vlaneseq
        %v708 = vshrl.u32 %v707, 7
        %v709 = vsub.s32 0, %v708
        %v710 = vrot.slane %v666, %v709
        %v711 = vlaneseq
        %v712 = vshrl.u32 %v711, 7
        %v713 = vsub.s32 1, %v712
        %v714 = vrot.slane %v666, %v713
        %v715 = vlaneseq
        %v716 = vshrl.u32 %v715, 7
        %v717 = vsub.s32 2, %v716
        %v718 = vrot.slane %v666, %v717
        %v719 = vlaneseq
        %v720 = vshrl.u32 %v719, 7
        %v721 = vsub.s32 3, %v720
        %v722 = vrot.slane %v666, %v721
        %v723 = vlaneseq
        %v724 = vshrl.u32 %v723, 7
        %v725 = vsub.s32 4, %v724
        %v726 = vrot.slane %v666, %v725
        %v727 = vlaneseq
        %v728 = vshrl.u32 %v727, 7
        %v729 = vsub.s32 5, %v728
        %v730 = vrot.slane %v666, %v729
        %v731 = vlaneseq
        %v732 = vshrl.u32 %v731, 7
        %v733 = vsub.s32 6, %v732
        %v734 = vrot.slane %v666, %v733
        %v735 = vlaneseq
        %v736 = vshrl.u32 %v735, 7
        %v737 = vsub.s32 7, %v736
        %v738 = vrot.slane %v666, %v737
        %v739 = vlaneseq
        %v740 = vshrl.u32 %v739, 7
        %v741 = vsub.s32 0, %v740
        %v742 = vrot.slane %v668, %v741
        %v743 = vlaneseq
        %v744 = vshrl.u32 %v743, 7
        %v745 = vsub.s32 1, %v744
        %v746 = vrot.slane %v668, %v745
        %v747 = vlaneseq
        %v748 = vshrl.u32 %v747, 7
        %v749 = vsub.s32 2, %v748
        %v750 = vrot.slane %v668, %v749
        %v751 = vlaneseq
        %v752 = vshrl.u32 %v751, 7
        %v753 = vsub.s32 3, %v752
        %v754 = vrot.slane %v668, %v753
        %v755 = vlaneseq
        %v756 = vshrl.u32 %v755, 7
        %v757 = vsub.s32 4, %v756
        %v758 = vrot.slane %v668, %v757
        %v759 = vlaneseq
        %v760 = vshrl.u32 %v759, 7
        %v761 = vsub.s32 5, %v760
        %v762 = vrot.slane %v668, %v761
        %v763 = vlaneseq
        %v764 = vshrl.u32 %v763, 7
        %v765 = vsub.s32 6, %v764
        %v766 = vrot.slane %v668, %v765
        %v767 = vlaneseq
        %v768 = vshrl.u32 %v767, 7
        %v769 = vsub.s32 7, %v768
        %v770 = vrot.slane %v668, %v769
        %v771 = vlaneseq
        %v772 = vshrl.u32 %v771, 7
        %v773 = vsub.s32 0, %v772
        %v774 = vrot.slane %v670, %v773
        %v775 = vlaneseq
        %v776 = vshrl.u32 %v775, 7
        %v777 = vsub.s32 1, %v776
        %v778 = vrot.slane %v670, %v777
        %v779 = vlaneseq
        %v780 = vshrl.u32 %v779, 7
        %v781 = vsub.s32 2, %v780
        %v782 = vrot.slane %v670, %v781
        %v783 = vlaneseq
        %v784 = vshrl.u32 %v783, 7
        %v785 = vsub.s32 3, %v784
        %v786 = vrot.slane %v670, %v785
        %v787 = vlaneseq
        %v788 = vshrl.u32 %v787, 7
        %v789 = vsub.s32 4, %v788
        %v790 = vrot.slane %v670, %v789
        %v791 = vlaneseq
        %v792 = vshrl.u32 %v791, 7
        %v793 = vsub.s32 5, %v792
        %v794 = vrot.slane %v670, %v793
        %v795 = vlaneseq
        %v796 = vshrl.u32 %v795, 7
        %v797 = vsub.s32 6, %v796
        %v798 = vrot.slane %v670, %v797
        %v799 = vlaneseq
        %v800 = vshrl.u32 %v799, 7
        %v801 = vsub.s32 7, %v800
        %v802 = vrot.slane %v670, %v801
        %v803 = vcombine.low %v678, %v682
        %v804 = vcombine.low %v686, %v690
        %v805 = vcombine.low %v694, %v698
        %v806 = vcombine.low %v702, %v706
        %v808 = vunpack.c.l.s4 1966171168
        %v809 = vunpack.c.0.s8 %v808
        %v810 = vlaneseq
        %v811 = vshrl.u32 %v810, 7
        %v812 = vsub.s32 %v809, %v811
        %v813 = vrot.slane %v803, %v812
        %v815 = vunpack.c.l.s4 1966171168
        %v816 = vunpack.c.0.s8 %v815
        %v817 = vlaneseq
        %v818 = vshrl.u32 %v817, 7
        %v819 = vsub.s32 %v816, %v818
        %v820 = vrot.slane %v804, %v819
        %v822 = vunpack.c.l.s4 1966171168
        %v823 = vunpack.c.0.s8 %v822
        %v824 = vlaneseq
        %v825 = vshrl.u32 %v824, 7
        %v826 = vsub.s32 %v823, %v825
        %v827 = vrot.slane %v805, %v826
        %v829 = vunpack.c.l.s4 1966171168
        %v830 = vunpack.c.0.s8 %v829
        %v831 = vlaneseq
        %v832 = vshrl.u32 %v831, 7
        %v833 = vsub.s32 %v830, %v832
        %v834 = vrot.slane %v806, %v833
        %v835 = vcombine.low %v813, %v820
        %v836 = vcombine.low %v827, %v834
        %v838 = vunpack.c.l.s4 1966171168
        %v839 = vunpack.c.0.s8 %v838
        %v840 = vlaneseq
        %v841 = vshrl.u32 %v840, 7
        %v842 = vsub.s32 %v839, %v841
        %v843 = vrot.slane %v835, %v842
        %v845 = vunpack.c.l.s4 1966171168
        %v846 = vunpack.c.0.s8 %v845
        %v847 = vlaneseq
        %v848 = vshrl.u32 %v847, 7
        %v849 = vsub.s32 %v846, %v848
        %v850 = vrot.slane %v836, %v849
        %v851 = vcombine.low %v843, %v850
        %v852 = vcombine.low %v710, %v714
        %v853 = vcombine.low %v718, %v722
        %v854 = vcombine.low %v726, %v730
        %v855 = vcombine.low %v734, %v738
        %v857 = vunpack.c.l.s4 1966171168
        %v858 = vunpack.c.0.s8 %v857
        %v859 = vlaneseq
        %v860 = vshrl.u32 %v859, 7
        %v861 = vsub.s32 %v858, %v860
        %v862 = vrot.slane %v852, %v861
        %v864 = vunpack.c.l.s4 1966171168
        %v865 = vunpack.c.0.s8 %v864
        %v866 = vlaneseq
        %v867 = vshrl.u32 %v866, 7
        %v868 = vsub.s32 %v865, %v867
        %v869 = vrot.slane %v853, %v868
        %v871 = vunpack.c.l.s4 1966171168
        %v872 = vunpack.c.0.s8 %v871
        %v873 = vlaneseq
        %v874 = vshrl.u32 %v873, 7
        %v875 = vsub.s32 %v872, %v874
        %v876 = vrot.slane %v854, %v875
        %v878 = vunpack.c.l.s4 1966171168
        %v879 = vunpack.c.0.s8 %v878
        %v880 = vlaneseq
        %v881 = vshrl.u32 %v880, 7
        %v882 = vsub.s32 %v879, %v881
        %v883 = vrot.slane %v855, %v882
        %v884 = vcombine.low %v862, %v869
        %v885 = vcombine.low %v876, %v883
        %v887 = vunpack.c.l.s4 1966171168
        %v888 = vunpack.c.0.s8 %v887
        %v889 = vlaneseq
        %v890 = vshrl.u32 %v889, 7
        %v891 = vsub.s32 %v888, %v890
        %v892 = vrot.slane %v884, %v891
        %v894 = vunpack.c.l.s4 1966171168
        %v895 = vunpack.c.0.s8 %v894
        %v896 = vlaneseq
        %v897 = vshrl.u32 %v896, 7
        %v898 = vsub.s32 %v895, %v897
        %v899 = vrot.slane %v885, %v898
        %v900 = vcombine.low %v892, %v899
        %v901 = vcombine.low %v742, %v746
        %v902 = vcombine.low %v750, %v754
        %v903 = vcombine.low %v758, %v762
        %v904 = vcombine.low %v766, %v770
        %v906 = vunpack.c.l.s4 1966171168
        %v907 = vunpack.c.0.s8 %v906
        %v908 = vlaneseq
        %v909 = vshrl.u32 %v908, 7
        %v910 = vsub.s32 %v907, %v909
        %v911 = vrot.slane %v901, %v910
        %v913 = vunpack.c.l.s4 1966171168
        %v914 = vunpack.c.0.s8 %v913
        %v915 = vlaneseq
        %v916 = vshrl.u32 %v915, 7
        %v917 = vsub.s32 %v914, %v916
        %v918 = vrot.slane %v902, %v917
        %v920 = vunpack.c.l.s4 1966171168
        %v921 = vunpack.c.0.s8 %v920
        %v922 = vlaneseq
        %v923 = vshrl.u32 %v922, 7
        %v924 = vsub.s32 %v921, %v923
        %v925 = vrot.slane %v903, %v924
        %v927 = vunpack.c.l.s4 1966171168
        %v928 = vunpack.c.0.s8 %v927
        %v929 = vlaneseq
        %v930 = vshrl.u32 %v929, 7
        %v931 = vsub.s32 %v928, %v930
        %v932 = vrot.slane %v904, %v931
        %v933 = vcombine.low %v911, %v918
        %v934 = vcombine.low %v925, %v932
        %v936 = vunpack.c.l.s4 1966171168
        %v937 = vunpack.c.0.s8 %v936
        %v938 = vlaneseq
        %v939 = vshrl.u32 %v938, 7
        %v940 = vsub.s32 %v937, %v939
        %v941 = vrot.slane %v933, %v940
        %v943 = vunpack.c.l.s4 1966171168
        %v944 = vunpack.c.0.s8 %v943
        %v945 = vlaneseq
        %v946 = vshrl.u32 %v945, 7
        %v947 = vsub.s32 %v944, %v946
        %v948 = vrot.slane %v934, %v947
        %v949 = vcombine.low %v941, %v948
        %v950 = vcombine.low %v774, %v778
        %v951 = vcombine.low %v782, %v786
        %v952 = vcombine.low %v790, %v794
        %v953 = vcombine.low %v798, %v802
        %v955 = vunpack.c.l.s4 1966171168
        %v956 = vunpack.c.0.s8 %v955
        %v957 = vlaneseq
        %v958 = vshrl.u32 %v957, 7
        %v959 = vsub.s32 %v956, %v958
        %v960 = vrot.slane %v950, %v959
        %v962 = vunpack.c.l.s4 1966171168
        %v963 = vunpack.c.0.s8 %v962
        %v964 = vlaneseq
        %v965 = vshrl.u32 %v964, 7
        %v966 = vsub.s32 %v963, %v965
        %v967 = vrot.slane %v951, %v966
        %v969 = vunpack.c.l.s4 1966171168
        %v970 = vunpack.c.0.s8 %v969
        %v971 = vlaneseq
        %v972 = vshrl.u32 %v971, 7
        %v973 = vsub.s32 %v970, %v972
        %v974 = vrot.slane %v952, %v973
        %v976 = vunpack.c.l.s4 1966171168
        %v977 = vunpack.c.0.s8 %v976
        %v978 = vlaneseq
        %v979 = vshrl.u32 %v978, 7
        %v980 = vsub.s32 %v977, %v979
        %v981 = vrot.slane %v953, %v980
        %v982 = vcombine.low %v960, %v967
        %v983 = vcombine.low %v974, %v981
        %v985 = vunpack.c.l.s4 1966171168
        %v986 = vunpack.c.0.s8 %v985
        %v987 = vlaneseq
        %v988 = vshrl.u32 %v987, 7
        %v989 = vsub.s32 %v986, %v988
        %v990 = vrot.slane %v982, %v989
        %v992 = vunpack.c.l.s4 1966171168
        %v993 = vunpack.c.0.s8 %v992
        %v994 = vlaneseq
        %v995 = vshrl.u32 %v994, 7
        %v996 = vsub.s32 %v993, %v995
        %v997 = vrot.slane %v983, %v996
        %v998 = vcombine.low %v990, %v997
        %999 = vset.pattern.permute.xlu0 0
        %1000 = vperm.xlu0 %999, %v851
        %v1001 = vpop.permute.xlu0 %1000
        %1002 = vset.pattern.permute.xlu0 0
        %1003 = vperm.xlu0 %1002, %v900
        %v1004 = vpop.permute.xlu0 %1003
        %1005 = vset.pattern.permute.xlu0 0
        %1006 = vperm.xlu0 %1005, %v949
        %v1007 = vpop.permute.xlu0 %1006
        %1008 = vset.pattern.permute.xlu0 0
        %1009 = vperm.xlu0 %1008, %v998
        %v1010 = vpop.permute.xlu0 %1009
        %v1011 = vlaneseq
        %v1012 = vshrl.u32 %v1011, 7
        %v1013 = vsub.s32 %v618, %v1012
        %v1014 = vrot.slane %v1001, %v1013
        %v1015 = vlaneseq
        %v1016 = vshrl.u32 %v1015, 7
        %v1017 = vsub.s32 %v623, %v1016
        %v1018 = vrot.slane %v1004, %v1017
        %v1019 = vsel %vm628, %v1018, %v1014
        %v1020 = vlaneseq
        %v1021 = vshrl.u32 %v1020, 7
        %v1022 = vsub.s32 %v630, %v1021
        %v1023 = vrot.slane %v1007, %v1022
        %v1024 = vsel %vm635, %v1023, %v1019
        %v1025 = vlaneseq
        %v1026 = vshrl.u32 %v1025, 7
        %v1027 = vsub.s32 %v637, %v1026
        %v1028 = vrot.slane %v1010, %v1027
        %v1029 = vsel %vm642, %v1028, %v1024
        %v1031 = vunpack.c.l.s4 1966171168
        %v1032 = vunpack.c.0.s8 %v1031
        %v1033 = vlaneseq
        %v1034 = vshrl.u32 %v1033, 7
        %v1035 = vsub.s32 %v1032, %v1034
        %v1036 = vrot.slane %v1029, %v1035
        %v1038 = vunpack.c.l.s4 1966171168
        %v1039 = vunpack.c.0.s8 %v1038
        %v1040 = vlaneseq
        %v1041 = vshrl.u32 %v1040, 7
        %v1042 = vsub.s32 %v1039, %v1041
        %v1043 = vrot.slane %v1036, %v1042
        %v1045 = vmax.f32 %v662, %v1043
        %1046 = vst.msk [vmem:[#allocation3] sm:$0x1] %vm660, %v1045
        %p1047 = scmp.eq.s32.totalorder %s27, 1
        // Predicated region
        $region49: #{tpu_custom_call.1} parent=39 // pred_check
          %p1048 = pneg %p1047
        $region50: #{tpu_custom_call.1} parent=39 // pred_check_branch
          %1050 = sbr.rel (%p1048) target = $region52
        $region51: #{tpu_custom_call.1} parent=39 // pred_region
          %v1051 = vld [vmem:[#allocation2] sm:$0x1]
          %v1052 = vmul.f32 %v1051, 0.00390625
          %v1053 = vld [vmem:[#allocation3] sm:$0x1]
          %v1054 = vld [vmem:[%s1] sm:$0xff]
          %v1055 = vld [vmem:[%s1 + $0x8] sm:$0xff]
          %v1056 = vld [vmem:[%s1 + $0x10] sm:$0xff]
          %v1057 = vld [vmem:[%s1 + $0x18] sm:$0xff]
          %v1058 = vld [vmem:[%s2] sm:$0x1]
          %v1059 = vld [vmem:[%s3] sm:$0x3]
          %v1060 = vld [vmem:[%s4] sm:$0x1]
          %vm1061 = vcmask 261120
          %v1063 = vsel %vm1061, %v1052, 0
          %1065 = vmatprep.subr.mxu0 0.0
          %1066 = vmatpush1.msra.mxu0 0.0
          %1067 = vmatprep.subr.mxu0 0.0
          %1068 = vmatpush1.msra.mxu0 0.0
          %1069 = vmatprep.subr.mxu0 0.0
          %1070 = vmatpush1.msra.mxu0 0.0
          %1071 = vmatprep.subr.mxu0 0.0
          %1072 = vmatpush1.msra.mxu0 0.0
          %1073 = vmatprep.subr.mxu0 0.0
          %1074 = vmatpush1.msra.mxu0 0.0
          %1075 = vmatprep.subr.mxu0 0.0
          %1076 = vmatpush1.msra.mxu0 0.0
          %1077 = vmatprep.subr.mxu0 0.0
          %1078 = vmatpush1.msra.mxu0 0.0
          %1079 = vmatprep.subr.mxu0 0.0
          %1080 = vmatpush1.msra.mxu0 0.0
          %1081 = vmatprep.subr.mxu0 0.0
          %1082 = vmatpush1.msra.mxu0 0.0
          %1083 = vmatprep.subr.mxu0 0.0
          %1084 = vmatpush1.msra.mxu0 0.0
          %1085 = vmatprep.subr.mxu0 0.0
          %1086 = vmatpush1.msra.mxu0 0.0
          %1087 = vmatprep.subr.mxu0 0.0
          %1088 = vmatpush1.msra.mxu0 0.0
          %1089 = vmatprep.subr.mxu0 0.0
          %1090 = vmatpush1.msra.mxu0 %v1057
          %1091 = vmatprep.subr.mxu0 0.0
          %1092 = vmatpush1.msra.mxu0 %v1056
          %1093 = vmatprep.subr.mxu0 0.0
          %1094 = vmatpush1.msra.mxu0 %v1055
          %1095 = vmatprep.subr.mxu0 0.0
          %1096 = vmatpush1.msra.mxu0 %v1054
          %1097 = vmatprep.subr.mxu0 0.0
          %1098 = vmatpush2.msra.mxu0 0.0
          %1099 = vmatprep.subr.mxu0 0.0
          %1100 = vmatpush2.msra.mxu0 0.0
          %1101 = vmatprep.subr.mxu0 0.0
          %1102 = vmatpush2.msra.mxu0 0.0
          %1103 = vmatprep.subr.mxu0 0.0
          %1104 = vmatpush2.msra.mxu0 0.0
          %1105 = vmatprep.subr.mxu0 0.0
          %1106 = vmatpush2.msra.mxu0 0.0
          %1107 = vmatprep.subr.mxu0 0.0
          %1108 = vmatpush2.msra.mxu0 0.0
          %1109 = vmatprep.subr.mxu0 0.0
          %1110 = vmatpush2.msra.mxu0 0.0
          %1111 = vmatprep.subr.mxu0 0.0
          %1112 = vmatpush2.msra.mxu0 0.0
          %1113 = vmatprep.subr.mxu0 0.0
          %1114 = vmatpush2.msra.mxu0 0.0
          %1115 = vmatprep.subr.mxu0 0.0
          %1116 = vmatpush2.msra.mxu0 0.0
          %1117 = vmatprep.subr.mxu0 0.0
          %1118 = vmatpush2.msra.mxu0 0.0
          %1119 = vmatprep.subr.mxu0 0.0
          %1120 = vmatpush2.msra.mxu0 0.0
          %1121 = vmatprep.subr.mxu0 0.0
          %1122 = vmatpush2.msra.mxu0 0.0
          %1123 = vmatprep.subr.mxu0 0.0
          %1124 = vmatpush2.msra.mxu0 0.0
          %1125 = vmatprep.subr.mxu0 0.0
          %1126 = vmatpush2.msra.mxu0 0.0
          %1127 = vmatprep.subr.mxu0 0.0
          %1128 = vmatpush2.msra.mxu0 0.0
          %1129 = vmatprep.mubr.f32.mxu0 0.0
          %1130 = vmatmul.mubr.f32.gmra.mxu0 %v1063
          %v1131 = vpop.f32.mrf.mxu0
          %v1132 = vadd.f32 %v1058, %v1131
          %v1133 = vpop.f32.mrf.mxu0
          %1134 = vdwg.mxu0
          %v1135 = vmax.f32 %v1132, 0.0
          %vm1136 = vcmask 15360
          %v1138 = vsel %vm1136, %v1135, 0
          %vm1140 = vcmask 1041408
          %v1142 = vsel %vm1140, %v1059, 0
          %1144 = vmatprep.subr.mxu0 0.0
          %1145 = vmatpush1.msra.mxu0 0.0
          %1146 = vmatprep.subr.mxu0 0.0
          %1147 = vmatpush1.msra.mxu0 0.0
          %1148 = vmatprep.subr.mxu0 0.0
          %1149 = vmatpush1.msra.mxu0 0.0
          %1150 = vmatprep.subr.mxu0 0.0
          %1151 = vmatpush1.msra.mxu0 0.0
          %1152 = vmatprep.subr.mxu0 0.0
          %1153 = vmatpush1.msra.mxu0 0.0
          %1154 = vmatprep.subr.mxu0 0.0
          %1155 = vmatpush1.msra.mxu0 0.0
          %1156 = vmatprep.subr.mxu0 0.0
          %1157 = vmatpush1.msra.mxu0 0.0
          %1158 = vmatprep.subr.mxu0 0.0
          %1159 = vmatpush1.msra.mxu0 0.0
          %1160 = vmatprep.subr.mxu0 0.0
          %1161 = vmatpush1.msra.mxu0 0.0
          %1162 = vmatprep.subr.mxu0 0.0
          %1163 = vmatpush1.msra.mxu0 0.0
          %1164 = vmatprep.subr.mxu0 0.0
          %1165 = vmatpush1.msra.mxu0 0.0
          %1166 = vmatprep.subr.mxu0 0.0
          %1167 = vmatpush1.msra.mxu0 0.0
          %1168 = vmatprep.subr.mxu0 0.0
          %1169 = vmatpush1.msra.mxu0 0.0
          %1170 = vmatprep.subr.mxu0 0.0
          %1171 = vmatpush1.msra.mxu0 0.0
          %1172 = vmatprep.subr.mxu0 0.0
          %1173 = vmatpush1.msra.mxu0 0.0
          %1174 = vmatprep.subr.mxu0 0.0
          %1175 = vmatpush1.msra.mxu0 %v1142
          %1176 = vmatprep.subr.mxu0 0.0
          %1177 = vmatpush2.msra.mxu0 0.0
          %1178 = vmatprep.subr.mxu0 0.0
          %1179 = vmatpush2.msra.mxu0 0.0
          %1180 = vmatprep.subr.mxu0 0.0
          %1181 = vmatpush2.msra.mxu0 0.0
          %1182 = vmatprep.subr.mxu0 0.0
          %1183 = vmatpush2.msra.mxu0 0.0
          %1184 = vmatprep.subr.mxu0 0.0
          %1185 = vmatpush2.msra.mxu0 0.0
          %1186 = vmatprep.subr.mxu0 0.0
          %1187 = vmatpush2.msra.mxu0 0.0
          %1188 = vmatprep.subr.mxu0 0.0
          %1189 = vmatpush2.msra.mxu0 0.0
          %1190 = vmatprep.subr.mxu0 0.0
          %1191 = vmatpush2.msra.mxu0 0.0
          %1192 = vmatprep.subr.mxu0 0.0
          %1193 = vmatpush2.msra.mxu0 0.0
          %1194 = vmatprep.subr.mxu0 0.0
          %1195 = vmatpush2.msra.mxu0 0.0
          %1196 = vmatprep.subr.mxu0 0.0
          %1197 = vmatpush2.msra.mxu0 0.0
          %1198 = vmatprep.subr.mxu0 0.0
          %1199 = vmatpush2.msra.mxu0 0.0
          %1200 = vmatprep.subr.mxu0 0.0
          %1201 = vmatpush2.msra.mxu0 0.0
          %1202 = vmatprep.subr.mxu0 0.0
          %1203 = vmatpush2.msra.mxu0 0.0
          %1204 = vmatprep.subr.mxu0 0.0
          %1205 = vmatpush2.msra.mxu0 0.0
          %1206 = vmatprep.subr.mxu0 0.0
          %1207 = vmatpush2.msra.mxu0 0.0
          %1208 = vmatprep.mubr.f32.mxu0 0.0
          %1209 = vmatmul.mubr.f32.gmra.mxu0 %v1138
          %v1210 = vpop.f32.mrf.mxu0
          %v1211 = vadd.f32 %v1060, %v1210
          %v1212 = vpop.f32.mrf.mxu0
          %1213 = vdwg.mxu0
          %v1215 = vsel %vm1061, %v1053, 0
          %1217 = vmatprep.subr.mxu0 0.0
          %1218 = vmatpush1.msra.mxu0 0.0
          %1219 = vmatprep.subr.mxu0 0.0
          %1220 = vmatpush1.msra.mxu0 0.0
          %1221 = vmatprep.subr.mxu0 0.0
          %1222 = vmatpush1.msra.mxu0 0.0
          %1223 = vmatprep.subr.mxu0 0.0
          %1224 = vmatpush1.msra.mxu0 0.0
          %1225 = vmatprep.subr.mxu0 0.0
          %1226 = vmatpush1.msra.mxu0 0.0
          %1227 = vmatprep.subr.mxu0 0.0
          %1228 = vmatpush1.msra.mxu0 0.0
          %1229 = vmatprep.subr.mxu0 0.0
          %1230 = vmatpush1.msra.mxu0 0.0
          %1231 = vmatprep.subr.mxu0 0.0
          %1232 = vmatpush1.msra.mxu0 0.0
          %1233 = vmatprep.subr.mxu0 0.0
          %1234 = vmatpush1.msra.mxu0 0.0
          %1235 = vmatprep.subr.mxu0 0.0
          %1236 = vmatpush1.msra.mxu0 0.0
          %1237 = vmatprep.subr.mxu0 0.0
          %1238 = vmatpush1.msra.mxu0 0.0
          %1239 = vmatprep.subr.mxu0 0.0
          %1240 = vmatpush1.msra.mxu0 0.0
          %1241 = vmatprep.subr.mxu0 0.0
          %1242 = vmatpush1.msra.mxu0 %v1057
          %1243 = vmatprep.subr.mxu0 0.0
          %1244 = vmatpush1.msra.mxu0 %v1056
          %1245 = vmatprep.subr.mxu0 0.0
          %1246 = vmatpush1.msra.mxu0 %v1055
          %1247 = vmatprep.subr.mxu0 0.0
          %1248 = vmatpush1.msra.mxu0 %v1054
          %1249 = vmatprep.subr.mxu0 0.0
          %1250 = vmatpush2.msra.mxu0 0.0
          %1251 = vmatprep.subr.mxu0 0.0
          %1252 = vmatpush2.msra.mxu0 0.0
          %1253 = vmatprep.subr.mxu0 0.0
          %1254 = vmatpush2.msra.mxu0 0.0
          %1255 = vmatprep.subr.mxu0 0.0
          %1256 = vmatpush2.msra.mxu0 0.0
          %1257 = vmatprep.subr.mxu0 0.0
          %1258 = vmatpush2.msra.mxu0 0.0
          %1259 = vmatprep.subr.mxu0 0.0
          %1260 = vmatpush2.msra.mxu0 0.0
          %1261 = vmatprep.subr.mxu0 0.0
          %1262 = vmatpush2.msra.mxu0 0.0
          %1263 = vmatprep.subr.mxu0 0.0
          %1264 = vmatpush2.msra.mxu0 0.0
          %1265 = vmatprep.subr.mxu0 0.0
          %1266 = vmatpush2.msra.mxu0 0.0
          %1267 = vmatprep.subr.mxu0 0.0
          %1268 = vmatpush2.msra.mxu0 0.0
          %1269 = vmatprep.subr.mxu0 0.0
          %1270 = vmatpush2.msra.mxu0 0.0
          %1271 = vmatprep.subr.mxu0 0.0
          %1272 = vmatpush2.msra.mxu0 0.0
          %1273 = vmatprep.subr.mxu0 0.0
          %1274 = vmatpush2.msra.mxu0 0.0
          %1275 = vmatprep.subr.mxu0 0.0
          %1276 = vmatpush2.msra.mxu0 0.0
          %1277 = vmatprep.subr.mxu0 0.0
          %1278 = vmatpush2.msra.mxu0 0.0
          %1279 = vmatprep.subr.mxu0 0.0
          %1280 = vmatpush2.msra.mxu0 0.0
          %1281 = vmatprep.mubr.f32.mxu0 0.0
          %1282 = vmatmul.mubr.f32.gmra.mxu0 %v1215
          %v1283 = vpop.f32.mrf.mxu0
          %v1284 = vadd.f32 %v1058, %v1283
          %v1285 = vpop.f32.mrf.mxu0
          %1286 = vdwg.mxu0
          %v1287 = vmax.f32 %v1284, 0.0
          %v1289 = vsel %vm1136, %v1287, 0
          %1291 = vmatprep.subr.mxu0 0.0
          %1292 = vmatpush1.msra.mxu0 0.0
          %1293 = vmatprep.subr.mxu0 0.0
          %1294 = vmatpush1.msra.mxu0 0.0
          %1295 = vmatprep.subr.mxu0 0.0
          %1296 = vmatpush1.msra.mxu0 0.0
          %1297 = vmatprep.subr.mxu0 0.0
          %1298 = vmatpush1.msra.mxu0 0.0
          %1299 = vmatprep.subr.mxu0 0.0
          %1300 = vmatpush1.msra.mxu0 0.0
          %1301 = vmatprep.subr.mxu0 0.0
          %1302 = vmatpush1.msra.mxu0 0.0
          %1303 = vmatprep.subr.mxu0 0.0
          %1304 = vmatpush1.msra.mxu0 0.0
          %1305 = vmatprep.subr.mxu0 0.0
          %1306 = vmatpush1.msra.mxu0 0.0
          %1307 = vmatprep.subr.mxu0 0.0
          %1308 = vmatpush1.msra.mxu0 0.0
          %1309 = vmatprep.subr.mxu0 0.0
          %1310 = vmatpush1.msra.mxu0 0.0
          %1311 = vmatprep.subr.mxu0 0.0
          %1312 = vmatpush1.msra.mxu0 0.0
          %1313 = vmatprep.subr.mxu0 0.0
          %1314 = vmatpush1.msra.mxu0 0.0
          %1315 = vmatprep.subr.mxu0 0.0
          %1316 = vmatpush1.msra.mxu0 0.0
          %1317 = vmatprep.subr.mxu0 0.0
          %1318 = vmatpush1.msra.mxu0 0.0
          %1319 = vmatprep.subr.mxu0 0.0
          %1320 = vmatpush1.msra.mxu0 0.0
          %1321 = vmatprep.subr.mxu0 0.0
          %1322 = vmatpush1.msra.mxu0 %v1142
          %1323 = vmatprep.subr.mxu0 0.0
          %1324 = vmatpush2.msra.mxu0 0.0
          %1325 = vmatprep.subr.mxu0 0.0
          %1326 = vmatpush2.msra.mxu0 0.0
          %1327 = vmatprep.subr.mxu0 0.0
          %1328 = vmatpush2.msra.mxu0 0.0
          %1329 = vmatprep.subr.mxu0 0.0
          %1330 = vmatpush2.msra.mxu0 0.0
          %1331 = vmatprep.subr.mxu0 0.0
          %1332 = vmatpush2.msra.mxu0 0.0
          %1333 = vmatprep.subr.mxu0 0.0
          %1334 = vmatpush2.msra.mxu0 0.0
          %1335 = vmatprep.subr.mxu0 0.0
          %1336 = vmatpush2.msra.mxu0 0.0
          %1337 = vmatprep.subr.mxu0 0.0
          %1338 = vmatpush2.msra.mxu0 0.0
          %1339 = vmatprep.subr.mxu0 0.0
          %1340 = vmatpush2.msra.mxu0 0.0
          %1341 = vmatprep.subr.mxu0 0.0
          %1342 = vmatpush2.msra.mxu0 0.0
          %1343 = vmatprep.subr.mxu0 0.0
          %1344 = vmatpush2.msra.mxu0 0.0
          %1345 = vmatprep.subr.mxu0 0.0
          %1346 = vmatpush2.msra.mxu0 0.0
          %1347 = vmatprep.subr.mxu0 0.0
          %1348 = vmatpush2.msra.mxu0 0.0
          %1349 = vmatprep.subr.mxu0 0.0
          %1350 = vmatpush2.msra.mxu0 0.0
          %1351 = vmatprep.subr.mxu0 0.0
          %1352 = vmatpush2.msra.mxu0 0.0
          %1353 = vmatprep.subr.mxu0 0.0
          %1354 = vmatpush2.msra.mxu0 0.0
          %1355 = vmatprep.mubr.f32.mxu0 0.0
          %1356 = vmatmul.mubr.f32.gmra.mxu0 %v1289
          %v1357 = vpop.f32.mrf.mxu0
          %v1358 = vadd.f32 %v1060, %v1357
          %v1359 = vpop.f32.mrf.mxu0
          %1360 = vdwg.mxu0
          %v1361 = vadd.f32 %v1211, %v1358
          %v1362 = vxor.u32 %v1361, 2147483648
          %v1363 = vmul.f32 %v1362, 1.442695
          %v1364 = vpow.pop %v1363
          %v1365 = vadd.f32 %v1364, 1.0
          %v1366 = vrcp.pop %v1365
          %v1367 = vmul.f32 1.0, %v1366
          %1368 = vst.msk [vmem:[%s256] sm:$0x1] %vm660, %v1367
        $region52: #{tpu_custom_call.1} parent=39 // pred_fallthru
          _
        %s1369 = sand.u32 %s154, 1
        %s1370 = scalar_lea.sflag [#allocation6], %s1369
        %s1371 = sand.u32 %s154, 1
        %s1372 = scalar_lea.vmem [#allocation7], %s1371
        // Predicated region
        $region53: #{tpu_custom_call.1} parent=39 // pred_check
          %p1373 = pneg %p164
        $region54: #{tpu_custom_call.1} parent=39 // pred_check_branch
          %1375 = sbr.rel (%p1373) target = $region56
        $region55: #{tpu_custom_call.1} parent=39 // pred_region
          %s1377 = ssub.s32 16, 16
          %1378 = vsyncadd %s1370, %s1377
          %s1379 = smul.addr %s26, 16
          %s1380 = scalar_lea.hbm %s5, %s1379
          %s1382 = sshll.u32 %s1372, 4
          %s1383 = int_to_ptr.vmem [resolvable:$true] %s1382
          %1385 = dma.vmem_to_hbm [thread:$0]  %s1383, 16, %s1380, %s1370
        $region56: #{tpu_custom_call.1} parent=39 // pred_fallthru
          _
      $region40: #{tpu_custom_call.1} parent=5 // pred_fallthru
        _
      %p1386 = scmp.le.s32.totalorder 2, %s17
      // Predicated region
      $region57: #{tpu_custom_call.1} parent=5 // pred_check
        %p1387 = pneg %p1386
      $region58: #{tpu_custom_call.1} parent=5 // pred_check_branch
        %1389 = sbr.rel (%p1387) target = $region60
      $region59: #{tpu_custom_call.1} parent=5 // pred_region
        %s1390 = ssub.s32 %s17, 2
        // Predicated region
        $region61: #{tpu_custom_call.1} parent=59 // pred_check
          %p1391 = pneg %p170
        $region62: #{tpu_custom_call.1} parent=59 // pred_check_branch
          %1393 = sbr.rel (%p1391) target = $region64
        $region63: #{tpu_custom_call.1} parent=59 // pred_region
          %s1394 = sand.u32 %s155, 1
          %s1395 = scalar_lea.sflag [#allocation6], %s1394
          %s1396 = sand.u32 %s155, 1
          %s1397 = scalar_lea.vmem [#allocation7], %s1396
          %1398 = dma.done %s1395, 16
        $region64: #{tpu_custom_call.1} parent=59 // pred_fallthru
          _
      $region60: #{tpu_custom_call.1} parent=5 // pred_fallthru
        _
    $region6: #{tpu_custom_call.1} parent=1 // loop_footer
      %s21 = sadd.s32 1, %s17
    $region7: #{tpu_custom_call.1} parent=1 // loop_footer_branch
      %16 = sbr.rel target = $region3
    $region8: #{tpu_custom_call.1} parent=1 // loop_exit
      _
    %1399 = vsyncpa [#allocation5], 1
    %s1400 = scalar_lea.sflag [#allocation5], 1
    %1401 = vsyncpa %s1400, 1
    %1402 = vsyncpa [#allocation6], 1
    %s1403 = scalar_lea.sflag [#allocation6], 1
    %1404 = vsyncpa %s1403, 1

</llo_original>
